<compile_context>
chip_gen: v6e
topology: v6e:2x2x1
jax: 0.10.0
libtpu: 0.0.40
codegen_flags: <defaults>
</compile_context>

<pallas_src>
import functools

import jax
import jax.numpy as jnp
from jax.experimental import pallas as pl
from jax.experimental.pallas import tpu as pltpu


def _round_up(a, b):
    return ((a + b - 1) // b) * b


def _cdiv(a, b):
    return -(-a // b)


def _vmem_capacity_bytes():
    """Chip VMEM capacity; conservative 64 MiB fallback (v7x-sized)."""
    default = 64 * 1024 * 1024
    try:
        info = pltpu.get_tpu_info()
        return int(getattr(info, "vmem_capacity_bytes", default))
    except Exception:
        return default


# --------------------------------------------------------------------------
# Kernels
# --------------------------------------------------------------------------

def _single_tile_conv_kernel(x_ref, w_ref, o_ref, xcol_ref, *, dilation,
                             c_in, c_in_pad, k_size, l_out):
    # x_ref: (1, C_in, L_in_padded)   w_ref: (C_out, K*C_in_pad)
    # o_ref: (1, C_out, L_out)        xcol_ref: VMEM (K*C_in_pad, L_out)
    for k in range(k_size):                      # static unroll
        d = k * dilation
        r0 = k * c_in_pad
        xcol_ref[r0:r0 + c_in, :] = x_ref[0, :, d:d + l_out]
        if c_in_pad > c_in:
            # zero the sublane-alignment pad rows (scratch VMEM is otherwise
            # uninitialized; NaN*0 would contaminate the dot).
            xcol_ref[r0 + c_in:r0 + c_in_pad, :] = jnp.zeros(
                (c_in_pad - c_in, l_out), xcol_ref.dtype)
    # Single deep MXU contraction over K*C_in_pad, f32 accumulate.
    o_ref[0] = jnp.dot(w_ref[...], xcol_ref[...],
                       preferred_element_type=jnp.float32).astype(o_ref.dtype)


def _halo_conv_kernel(x_ref, xh_ref, w_ref, o_ref, xcol_ref, *, dilation,
                      c_in, c_in_pad, k_size, l_tile):
    # x_ref:  (1, C_in, L_TILE)     current input tile
    # xh_ref: (1, C_in, HALO_BLK)   right halo (next lanes of the same array)
    # w_ref:  (C_out, K*C_in_pad)   tap-major weight rows
    # o_ref:  (1, C_out, L_TILE)    xcol_ref: VMEM (K*C_in_pad, L_TILE)
    for k in range(k_size):                      # static unroll
        d = k * dilation
        r0 = k * c_in_pad
        if d == 0:
            xcol_ref[r0:r0 + c_in, :] = x_ref[0]
        else:
            # Write the shifted main part and the d trailing halo lanes
            # directly -- no concatenate temporary.
            xcol_ref[r0:r0 + c_in, :l_tile - d] = x_ref[0, :, d:]
            xcol_ref[r0:r0 + c_in, l_tile - d:] = xh_ref[0, :, :d]
        if c_in_pad > c_in:
            xcol_ref[r0 + c_in:r0 + c_in_pad, :] = jnp.zeros(
                (c_in_pad - c_in, l_tile), xcol_ref.dtype)
    o_ref[0] = jnp.dot(w_ref[...], xcol_ref[...],
                       preferred_element_type=jnp.float32).astype(o_ref.dtype)


def _matmul_conv_kernel(xc_ref, w_ref, o_ref):
    # stride>1 path: im2col columns were pre-built in the wrapper.
    # xc_ref: (1, K*C_in, L) w_ref: (C_out, K*C_in) o_ref: (1, C_out, L)
    o_ref[0] = jnp.dot(w_ref[...], xc_ref[0],
                       preferred_element_type=jnp.float32).astype(o_ref.dtype)


# --------------------------------------------------------------------------
# Wrapper
# --------------------------------------------------------------------------

def sorth_conv_forward(x, weight, *, stride=1, padding=0, dilation=1,
                       padding_mode="zeros", compute_dtype=jnp.bfloat16,
                       l_tile_target=2048):
    """Pallas implementation of SOrthConv.forward (Conv1d, bias=False).

    x: (B, C_in, L)   weight: (C_out, C_in, K)   returns (B, C_out, L_out).
    """
    if padding_mode != "zeros":
        # TODO(synk): only padding_mode='zeros' (nn.Conv1d default) supported.
        raise NotImplementedError("only padding_mode='zeros' is supported")

    b, c_in, l_in = x.shape
    c_out, c_in_w, k_size = weight.shape
    assert c_in == c_in_w and k_size >= 1
    out_dtype = x.dtype
    if compute_dtype is None:
        compute_dtype = x.dtype

    l_pad_len = l_in + 2 * padding
    l_out = (l_pad_len - dilation * (k_size - 1) - 1) // stride + 1
    assert l_out > 0

    in_b = jnp.dtype(compute_dtype).itemsize
    out_b = jnp.dtype(out_dtype).itemsize
    pack = 8 * (4 // in_b)                 # sublane rows per vreg tile
    rows_o = _round_up(c_out, pack)

    cap = _vmem_capacity_bytes()
    # ~40 MiB usable on v7x (64 MiB), ~90 MiB on v5e/v6e (128 MiB).
    usable = max(min(int(cap * 0.7), cap - (24 << 20)), 16 << 20)

    def _params(footprint_bytes):
        limit = int(max(32 << 20, min(footprint_bytes + (16 << 20),
                                      cap - (4 << 20))))
        return pltpu.CompilerParams(dimension_semantics=("parallel",),
                                    vmem_limit_bytes=limit)

    xp = x.astype(compute_dtype)
    if padding > 0:
        # The conv's own zero padding (only HBM copy in the common path).
        xp = jnp.pad(xp, ((0, 0), (0, 0), (padding, padding)))

    # ----------------------------------------------------------------------
    # stride == 1: haloed im2col + one deep MXU contraction per tile
    # ----------------------------------------------------------------------
    if stride == 1:
        halo = (k_size - 1) * dilation
        c_in_pad = _round_up(c_in, pack)
        rows_x = _round_up(c_in, pack)
        lanes_w = _round_up(k_size * c_in_pad, 128)

        # (C_out, C_in, K) -> (C_out, K, C_in_pad) -> (C_out, K*C_in_pad):
        # tap-major rows matching the im2col layout; pad cols are zero.
        wt = jnp.transpose(weight, (0, 2, 1)).astype(compute_dtype)
        if c_in_pad != c_in:
            wt = jnp.pad(wt, ((0, 0), (0, 0), (0, c_in_pad - c_in)))
        w2 = wt.reshape(c_out, k_size * c_in_pad)

        def fp_single():
            la = _round_up(l_out, 128)
            xa = _round_up(l_pad_len, 128)
            return ((2 * rows_x * xa + 2 * rows_o * lanes_w
                     + k_size * c_in_pad * la) * in_b
                    + 2 * rows_o * la * out_b)

        if l_out <= max(l_tile_target, 128) and fp_single() <= usable:
            # ---- single-tile exact path: full-dim blocks, no pad-to-tile,
            # ---- no output slice, no halo re-fetch.
            kernel = functools.partial(
                _single_tile_conv_kernel, dilation=dilation, c_in=c_in,
                c_in_pad=c_in_pad, k_size=k_size, l_out=l_out)
            return pl.pallas_call(
                kernel,
                out_shape=jax.ShapeDtypeStruct((b, c_out, l_out), out_dtype),
                grid_spec=pltpu.PrefetchScalarGridSpec(
                    num_scalar_prefetch=0,
                    grid=(b,),
                    in_specs=[
                        pl.BlockSpec((1, c_in, l_pad_len),
                                     lambda i: (i, 0, 0)),
                        pl.BlockSpec((c_out, k_size * c_in_pad),
                                     lambda i: (0, 0)),
                    ],
                    out_specs=pl.BlockSpec((1, c_out, l_out),
                                           lambda i: (i, 0, 0)),
                    scratch_shapes=[
                        pltpu.VMEM((k_size * c_in_pad, l_out), compute_dtype)],
                ),
                compiler_params=_params(fp_single()),
            )(xp, w2)

        # ---- multi-tile haloed path (long sequences) ----
        halo_blk = _round_up(max(halo, 1), 128)

        def fp_tiled(lt):
            return ((2 * rows_x * (lt + halo_blk) + 2 * rows_o * lanes_w
                     + k_size * c_in_pad * lt) * in_b
                    + 2 * rows_o * lt * out_b)

        l_tile = min(_round_up(l_out, halo_blk),
                     _round_up(max(l_tile_target, halo_blk), halo_blk))
        while l_tile > halo_blk and fp_tiled(l_tile) > usable:
            l_tile -= halo_blk
        n_lt = _cdiv(l_out, l_tile)
        ratio = l_tile // halo_blk
        l_out_pad = n_lt * l_tile

        # Pad so every (main + halo) block is fully in bounds.
        # TODO(synk): replace this pad and the final slice with masked ragged
        # boundary tiles to drop the remaining HBM copies on long inputs.
        x_cov = l_out_pad + halo_blk
        xp2 = jnp.pad(xp, ((0, 0), (0, 0), (0, x_cov - l_pad_len)))

        kernel = functools.partial(
            _halo_conv_kernel, dilation=dilation, c_in=c_in,
            c_in_pad=c_in_pad, k_size=k_size, l_tile=l_tile)

        out = pl.pallas_call(
            kernel,
            out_shape=jax.ShapeDtypeStruct((b, c_out, l_out_pad), out_dtype),
            grid_spec=pltpu.PrefetchScalarGridSpec(
                num_scalar_prefetch=0,
                grid=(b * n_lt,),          # flat parallel axis: balances 2 TCs
                in_specs=[
                    pl.BlockSpec((1, c_in, l_tile),
                                 lambda i: (i // n_lt, 0, i % n_lt)),
                    pl.BlockSpec((1, c_in, halo_blk),
                                 lambda i: (i // n_lt, 0,
                                            (i % n_lt + 1) * ratio)),
                    pl.BlockSpec((c_out, k_size * c_in_pad),
                                 lambda i: (0, 0)),
                ],
                out_specs=pl.BlockSpec((1, c_out, l_tile),
                                       lambda i: (i // n_lt, 0, i % n_lt)),
                scratch_shapes=[
                    pltpu.VMEM((k_size * c_in_pad, l_tile), compute_dtype)],
            ),
            compiler_params=_params(fp_tiled(l_tile)),
        )(xp2, xp2, w2)
        return out[:, :, :l_out]

    # ----------------------------------------------------------------------
    # stride > 1: wrapper-side im2col (strided slices) + tiled matmul kernel
    # ----------------------------------------------------------------------
    span = (l_out - 1) * stride + 1
    cols = [xp[:, :, k * dilation:k * dilation + span:stride]
            for k in range(k_size)]                         # each (B,C_in,L_out)
    xcol = jnp.concatenate(cols, axis=1)                    # (B, K*C_in, L_out)
    w2 = jnp.transpose(weight, (0, 2, 1)).reshape(
        c_out, k_size * c_in).astype(compute_dtype)

    rows_xc = _round_up(k_size * c_in, pack)
    lanes_w = _round_up(k_size * c_in, 128)

    def fp_mm(lt):
        return ((2 * rows_xc * lt + 2 * rows_o * lanes_w) * in_b
                + 2 * rows_o * lt * out_b)

    if l_out <= max(l_tile_target, 128) and fp_mm(_round_up(l_out, 128)) <= usable:
        # single-tile exact path: full-dim blocks, no pad / slice.
        return pl.pallas_call(
            _matmul_conv_kernel,
            out_shape=jax.ShapeDtypeStruct((b, c_out, l_out), out_dtype),
            grid_spec=pltpu.PrefetchScalarGridSpec(
                num_scalar_prefetch=0,
                grid=(b,),
                in_specs=[
                    pl.BlockSpec((1, k_size * c_in, l_out),
                                 lambda i: (i, 0, 0)),
                    pl.BlockSpec((c_out, k_size * c_in), lambda i: (0, 0)),
                ],
                out_specs=pl.BlockSpec((1, c_out, l_out),
                                       lambda i: (i, 0, 0)),
            ),
            compiler_params=_params(fp_mm(_round_up(l_out, 128))),
        )(xcol, w2)

    l_tile = min(_round_up(l_out, 128),
                 _round_up(max(l_tile_target, 128), 128))
    while l_tile > 128 and fp_mm(l_tile) > usable:
        l_tile -= 128
    n_lt = _cdiv(l_out, l_tile)
    l_out_pad = n_lt * l_tile
    xcol = jnp.pad(xcol, ((0, 0), (0, 0), (0, l_out_pad - l_out)))

    out = pl.pallas_call(
        _matmul_conv_kernel,
        out_shape=jax.ShapeDtypeStruct((b, c_out, l_out_pad), out_dtype),
        grid_spec=pltpu.PrefetchScalarGridSpec(
            num_scalar_prefetch=0,
            grid=(b * n_lt,),
            in_specs=[
                pl.BlockSpec((1, k_size * c_in, l_tile),
                             lambda i: (i // n_lt, 0, i % n_lt)),
                pl.BlockSpec((c_out, k_size * c_in), lambda i: (0, 0)),
            ],
            out_specs=pl.BlockSpec((1, c_out, l_tile),
                                   lambda i: (i // n_lt, 0, i % n_lt)),
        ),
        compiler_params=_params(fp_mm(l_tile)),
    )(xcol, w2)
    return out[:, :, :l_out]


def init_sorthconv_weight(key, in_channels, out_channels, kernel_size,
                          dtype=jnp.float32):
    """Mirrors SOrthConv.reset_parameters: normal(0, (in_ch*kernel_size)^-0.5)."""
    std = (in_channels * kernel_size) ** (-0.5)
    w = jax.random.normal(key, (out_channels, in_channels, kernel_size),
                          dtype=jnp.float32) * std
    return w.astype(dtype)


if __name__ == "__main__":
    key = jax.random.PRNGKey(0)
    kx, kw, kx2 = jax.random.split(key, 3)

    def ref_conv(x, w, stride, padding, dilation):
        return jax.lax.conv_general_dilated(
            x, w, window_strides=(stride,), padding=[(padding, padding)],
            rhs_dilation=(dilation,), dimension_numbers=("NCH", "OIH", "NCH"))

    B, C_IN, C_OUT, L, K = 2, 4, 8, 16, 3
    x = jax.random.normal(kx, (B, C_IN, L), dtype=jnp.float32)
    w = init_sorthconv_weight(kw, C_IN, C_OUT, K)

    # 1) stride=1 single-tile path, exact f32 compute (strict check).
    out = jax.block_until_ready(
        sorth_conv_forward(x, w, stride=1, padding=1, dilation=1,
                           compute_dtype=jnp.float32))
    ref = ref_conv(x, w, 1, 1, 1)
    assert out.shape == ref.shape == (B, C_OUT, L)
    assert jnp.allclose(out, ref, atol=1e-5, rtol=1e-5)

    # 2) stride=1, dilation=2 (strict check).
    out2 = jax.block_until_ready(
        sorth_conv_forward(x, w, stride=1, padding=2, dilation=2,
                           compute_dtype=jnp.float32))
    ref2 = ref_conv(x, w, 1, 2, 2)
    assert out2.shape == ref2.shape
    assert jnp.allclose(out2, ref2, atol=1e-5, rtol=1e-5)

    # 3) stride=2 single-tile im2col path (strict check).
    out3 = jax.block_until_ready(
        sorth_conv_forward(x, w, stride=2, padding=1, dilation=1,
                           compute_dtype=jnp.float32))
    ref3 = ref_conv(x, w, 2, 1, 1)
    assert out3.shape == ref3.shape
    assert jnp.allclose(out3, ref3, atol=1e-5, rtol=1e-5)

    # 4) default bf16 compute (MXU-friendly), loose check vs f32 reference.
    out4 = jax.block_until_ready(
        sorth_conv_forward(x, w, stride=1, padding=1, dilation=1))
    assert out4.shape == ref.shape
    assert jnp.allclose(out4, ref, atol=5e-2, rtol=5e-2)

    # 5) multi-tile haloed path (longer L, forced small tile) (strict check).
    L2 = 300
    x2 = jax.random.normal(kx2, (1, C_IN, L2), dtype=jnp.float32)
    out5 = jax.block_until_ready(
        sorth_conv_forward(x2, w, stride=1, padding=1, dilation=1,
                           compute_dtype=jnp.float32, l_tile_target=128))
    ref5 = ref_conv(x2, w, 1, 1, 1)
    assert out5.shape == ref5.shape == (1, C_OUT, L2)
    assert jnp.allclose(out5, ref5, atol=1e-5, rtol=1e-5)

    # 6) multi-tile stride=2 path (strict check).
    out6 = jax.block_until_ready(
        sorth_conv_forward(x2, w, stride=2, padding=1, dilation=1,
                           compute_dtype=jnp.float32, l_tile_target=128))
    ref6 = ref_conv(x2, w, 2, 1, 1)
    assert out6.shape == ref6.shape
    assert jnp.allclose(out6, ref6, atol=1e-5, rtol=1e-5)

    print("KERNEL_OK")
</pallas_src>

<mosaic_0001>
module attributes {stable_mosaic.version = 11 : i64} {
  func.func @_single_tile_conv_kernel(%arg0: i32, %arg1: memref<1x4x18xf32, #tpu.memory_space<vmem>>, %arg2: memref<8x24xf32, #tpu.memory_space<vmem>>, %arg3: memref<1x8x16xf32, #tpu.memory_space<vmem>>, %arg4: memref<24x16xf32, #tpu.memory_space<vmem>>) attributes {dimension_semantics = [#tpu.dimension_semantics<parallel>], iteration_bounds = array<i64: 2>, scalar_prefetch = 0 : i64, scratch_operands = 1 : i64, tpu.core_type = #tpu.core_type<tc>, window_params = [{transform_indices = @transform_0, window_bounds = array<i64: 1, 4, 18>}, {pipeline_mode = #tpu.pipeline_mode<synchronous>, transform_indices = @transform_1, window_bounds = array<i64: 8, 24>}, {transform_indices = @transform_2, window_bounds = array<i64: 1, 8, 16>}]} {
    %c0 = arith.constant 0 : index
    %c0_0 = arith.constant 0 : index
    %c0_1 = arith.constant 0 : index
    %0 = vector.load %arg1[%c0, %c0_0, %c0_1] : memref<1x4x18xf32, #tpu.memory_space<vmem>>, vector<1x4x16xf32>
    %1 = vector.shape_cast %0 : vector<1x4x16xf32> to vector<4x16xf32>
    %c0_2 = arith.constant 0 : index
    %c0_3 = arith.constant 0 : index
    %2 = vector.load %arg4[%c0_2, %c0_3] : memref<24x16xf32, #tpu.memory_space<vmem>>, vector<4x16xf32>
    tpu.vector_store %arg4[%c0_2, %c0_3], %1 {strides = array<i32>} : memref<24x16xf32, #tpu.memory_space<vmem>>, vector<4x16xf32>,
    %cst = arith.constant 0.000000e+00 : f32
    %3 = vector.broadcast %cst : f32 to vector<4x16xf32>
    %c4 = arith.constant 4 : index
    %c0_4 = arith.constant 0 : index
    %4 = vector.load %arg4[%c4, %c0_4] : memref<24x16xf32, #tpu.memory_space<vmem>>, vector<4x16xf32>
    tpu.vector_store %arg4[%c4, %c0_4], %3 {strides = array<i32>} : memref<24x16xf32, #tpu.memory_space<vmem>>, vector<4x16xf32>,
    %c0_5 = arith.constant 0 : index
    %c0_6 = arith.constant 0 : index
    %c1 = arith.constant 1 : index
    %5 = vector.load %arg1[%c0_5, %c0_6, %c1] : memref<1x4x18xf32, #tpu.memory_space<vmem>>, vector<1x4x16xf32>
    %6 = vector.shape_cast %5 : vector<1x4x16xf32> to vector<4x16xf32>
    %c8 = arith.constant 8 : index
    %c0_7 = arith.constant 0 : index
    %7 = vector.load %arg4[%c8, %c0_7] : memref<24x16xf32, #tpu.memory_space<vmem>>, vector<4x16xf32>
    tpu.vector_store %arg4[%c8, %c0_7], %6 {strides = array<i32>} : memref<24x16xf32, #tpu.memory_space<vmem>>, vector<4x16xf32>,
    %cst_8 = arith.constant 0.000000e+00 : f32
    %8 = vector.broadcast %cst_8 : f32 to vector<4x16xf32>
    %c12 = arith.constant 12 : index
    %c0_9 = arith.constant 0 : index
    %9 = vector.load %arg4[%c12, %c0_9] : memref<24x16xf32, #tpu.memory_space<vmem>>, vector<4x16xf32>
    tpu.vector_store %arg4[%c12, %c0_9], %8 {strides = array<i32>} : memref<24x16xf32, #tpu.memory_space<vmem>>, vector<4x16xf32>,
    %c0_10 = arith.constant 0 : index
    %c0_11 = arith.constant 0 : index
    %c2 = arith.constant 2 : index
    %10 = vector.load %arg1[%c0_10, %c0_11, %c2] : memref<1x4x18xf32, #tpu.memory_space<vmem>>, vector<1x4x16xf32>
    %11 = vector.shape_cast %10 : vector<1x4x16xf32> to vector<4x16xf32>
    %c16 = arith.constant 16 : index
    %c0_12 = arith.constant 0 : index
    %12 = vector.load %arg4[%c16, %c0_12] : memref<24x16xf32, #tpu.memory_space<vmem>>, vector<4x16xf32>
    tpu.vector_store %arg4[%c16, %c0_12], %11 {strides = array<i32>} : memref<24x16xf32, #tpu.memory_space<vmem>>, vector<4x16xf32>,
    %cst_13 = arith.constant 0.000000e+00 : f32
    %13 = vector.broadcast %cst_13 : f32 to vector<4x16xf32>
    %c20 = arith.constant 20 : index
    %c0_14 = arith.constant 0 : index
    %14 = vector.load %arg4[%c20, %c0_14] : memref<24x16xf32, #tpu.memory_space<vmem>>, vector<4x16xf32>
    tpu.vector_store %arg4[%c20, %c0_14], %13 {strides = array<i32>} : memref<24x16xf32, #tpu.memory_space<vmem>>, vector<4x16xf32>,
    %c0_15 = arith.constant 0 : index
    %c0_16 = arith.constant 0 : index
    %15 = vector.load %arg2[%c0_15, %c0_16] : memref<8x24xf32, #tpu.memory_space<vmem>>, vector<8x24xf32>
    %c0_17 = arith.constant 0 : index
    %c0_18 = arith.constant 0 : index
    %16 = vector.load %arg4[%c0_17, %c0_18] : memref<24x16xf32, #tpu.memory_space<vmem>>, vector<24x16xf32>
    %cst_19 = arith.constant dense<0.000000e+00> : vector<8x16xf32>
    %17 = tpu.matmul %15, %16, %cst_19 {dimension_numbers = #tpu.dot_dimension_numbers<[1], [0], [0], [1], [0, 0, 1, 1], [], []>} : vector<8x24xf32>, vector<24x16xf32>, vector<8x16xf32> -> vector<8x16xf32>
    %c0_20 = arith.constant 0 : index
    %c0_21 = arith.constant 0 : index
    %c0_22 = arith.constant 0 : index
    %18 = vector.load %arg3[%c0_20, %c0_21, %c0_22] : memref<1x8x16xf32, #tpu.memory_space<vmem>>, vector<1x8x16xf32>
    %19 = vector.shape_cast %18 : vector<1x8x16xf32> to vector<8x16xf32>
    %20 = vector.shape_cast %17 : vector<8x16xf32> to vector<1x8x16xf32>
    tpu.vector_store %arg3[%c0_20, %c0_21, %c0_22], %20 {strides = array<i32>} : memref<1x8x16xf32, #tpu.memory_space<vmem>>, vector<1x8x16xf32>,
    return
  }
  func.func @transform_0(%arg0: i32) -> (i32, i32, i32) {
    %c0_i32 = arith.constant 0 : i32
    %c0_i32_0 = arith.constant 0 : i32
    %c0_i32_1 = arith.constant 0 : i32
    return %arg0, %c0_i32, %c0_i32_0 : i32, i32, i32
  }
  func.func @transform_1(%arg0: i32) -> (i32, i32) {
    %c0_i32 = arith.constant 0 : i32
    %c0_i32_0 = arith.constant 0 : i32
    %c0_i32_1 = arith.constant 0 : i32
    return %c0_i32, %c0_i32_0 : i32, i32
  }
  func.func @transform_2(%arg0: i32) -> (i32, i32, i32) {
    %c0_i32 = arith.constant 0 : i32
    %c0_i32_0 = arith.constant 0 : i32
    %c0_i32_1 = arith.constant 0 : i32
    return %arg0, %c0_i32, %c0_i32_0 : i32, i32, i32
  }
}

</mosaic_0001>

<llo_original>
// kernel: tpu_custom_call.1
$region0: #{tpu_custom_call.1}
  #allocation0 [shape = 'u32[]', space=smem, size = 0x4, offset = 0x4, fixed_abs, tag = 'smem constant byte address 0x4 - core index']
  #allocation1 [shape = 'u32[144,128]{1,0:T(1,128)}', space=vmem, size = 0x12000, scoped, tag = 'internal scratch']
  #allocation2 [shape = 'f32[24,16]{1,0:T(8,128)}', space=vmem, size = 0x3000, scoped, tag = 'scratch operand']
  %s0 = inlined_call_operand.hbm [shape: f32[2,4,18], index: 0, kind: input, shape index: {}]
  %s1 = inlined_call_operand.hbm [shape: f32[8,24], index: 1, kind: input, shape index: {}]
  %s2 = inlined_call_operand.hbm [shape: f32[2,8,16], index: 2, kind: output, shape index: {}]
  %s3 = sld [smem:[#allocation0]]
  $region49: #{tpu_custom_call.1} parent=0
    _
  %s5 = ssub.s32 1, %s3
  %s6 = scalar_select 0, %s5, %s3
  $region1: #{tpu_custom_call.1} parent=0
    #allocation3 [shape = 'u8[4096]{0}', space=vmem, size = 0x1000, scoped, tag = 'input window, operand 0']
    #allocation4 [shape = 's32[2]{0}', space=sflag, size = 0x8, scoped, tag = 'scoped memory for tpu_custom_call.1']
    #allocation5 [shape = 's32[2]{0}', space=sflag, size = 0x8, scoped, tag = 'scoped memory for tpu_custom_call.1']
    #allocation6 [shape = 'u8[4096]{0}', space=vmem, size = 0x1000, scoped, tag = 'input window, operand 1, single buffered']
    #allocation7 [shape = 's32[1]{0}', space=sflag, size = 0x4, scoped, tag = 'scoped memory for tpu_custom_call.1']
    #allocation8 [shape = 'u8[8192]{0}', space=vmem, size = 0x2000, scoped, tag = 'output window, operand 0']
    %7 = vsyncpa [#allocation4], 0
    %s8 = scalar_lea.sflag [#allocation4], 1
    %9 = vsyncpa %s8, 0
    %10 = vsyncpa [#allocation7], 0
    %11 = vsyncpa [#allocation5], 0
    %s12 = scalar_lea.sflag [#allocation5], 1
    %13 = vsyncpa %s12, 0
    loop: start=0, step=1, limit=4
    $region2: #{tpu_custom_call.1} parent=1 // loop_pre_header
      _
    $region3: #{tpu_custom_call.1} parent=1 // loop_header
      %s15 = sphi 0, %s19
      %p16 = scmp.ge.s32.totalorder %s15, 4
      %s25 = sphi 0, %s27
      %s28 = sphi 0, %s25
      %s29 = sphi 0, %s28
      %s45 = sphi 0, %s29
      %s49 = sphi 0, %s49
      %s51 = sphi 0, %s49
      %s52 = sphi 0, %s51
      %s66 = sphi 0, %s52
      %s72 = sphi 0, %s74
      %s75 = sphi 0, %s72
      %s76 = sphi 0, %s75
      %s92 = sphi 0, %s76
    $region4: #{tpu_custom_call.1} parent=1 // loop_header_branch
      %18 = sbr.rel (%p16) target = $region8
    $region5: #{tpu_custom_call.1} parent=1 // loop_body
      %s20 = ssub.s32 %s15, 1
      %s21 = ssub.s32 %s15, 2
      %s22 = sadd.s32 %s15, 1
      %s23 = ssub.s32 %s15, %s22
      %p24 = scmp.eq.s32.totalorder %s23, 0
      %s26 = sadd.s32 %s25, 1
      %s27 = scalar_select %p24, %s25, %s26
      %p30 = pneg %p24
      %p31 = scmp.eq.s32.totalorder %s15, 1
      %p32 = por %p30, %p31
      %p33 = scmp.ne.s32.totalorder %s25, %s28
      %p34 = scmp.eq.s32.totalorder %s15, 0
      %p35 = por %p33, %p34
      %p36 = scmp.ne.s32.totalorder %s25, %s28
      %p37 = scmp.eq.s32.totalorder %s20, 1
      %p38 = por %p36, %p37
      %p39 = scmp.ne.s32.totalorder %s28, %s29
      %p40 = scmp.eq.s32.totalorder %s20, 0
      %p41 = por %p39, %p40
      %p42 = scmp.ne.s32.totalorder %s28, %s29
      %p43 = scmp.eq.s32.totalorder %s21, 1
      %p44 = por %p42, %p43
      %p46 = scmp.ne.s32.totalorder %s29, %s45
      %p47 = scmp.eq.s32.totalorder %s21, 0
      %p48 = por %p46, %p47
      %s50 = sadd.s32 %s49, 1
      %p53 = scmp.eq.s32.totalorder %s15, 1
      %p54 = scmp.ne.s32.totalorder %s49, %s51
      %p55 = scmp.eq.s32.totalorder %s15, 0
      %p56 = por %p54, %p55
      %p57 = scmp.ne.s32.totalorder %s49, %s51
      %p58 = scmp.eq.s32.totalorder %s20, 1
      %p59 = por %p57, %p58
      %p60 = scmp.ne.s32.totalorder %s51, %s52
      %p61 = scmp.eq.s32.totalorder %s20, 0
      %p62 = por %p60, %p61
      %p63 = scmp.ne.s32.totalorder %s51, %s52
      %p64 = scmp.eq.s32.totalorder %s21, 1
      %p65 = por %p63, %p64
      %p67 = scmp.ne.s32.totalorder %s52, %s66
      %p68 = scmp.eq.s32.totalorder %s21, 0
      %p69 = por %p67, %p68
      %s70 = ssub.s32 %s15, %s22
      %p71 = scmp.eq.s32.totalorder %s70, 0
      %s73 = sadd.s32 %s72, 1
      %s74 = scalar_select %p71, %s72, %s73
      %p77 = pneg %p71
      %p78 = scmp.eq.s32.totalorder %s15, 1
      %p79 = por %p77, %p78
      %p80 = scmp.ne.s32.totalorder %s72, %s75
      %p81 = scmp.eq.s32.totalorder %s15, 0
      %p82 = por %p80, %p81
      %p83 = scmp.ne.s32.totalorder %s72, %s75
      %p84 = scmp.eq.s32.totalorder %s20, 1
      %p85 = por %p83, %p84
      %p86 = scmp.ne.s32.totalorder %s75, %s76
      %p87 = scmp.eq.s32.totalorder %s20, 0
      %p88 = por %p86, %p87
      %p89 = scmp.ne.s32.totalorder %s75, %s76
      %p90 = scmp.eq.s32.totalorder %s21, 1
      %p91 = por %p89, %p90
      %p93 = scmp.ne.s32.totalorder %s76, %s92
      %p94 = scmp.eq.s32.totalorder %s21, 0
      %p95 = por %p93, %p94
      %p96 = scmp.le.s32.totalorder 1, %s15
      %p97 = scmp.lt.s32.totalorder %s15, 3
      %p98 = pnand %p96, %p97
      %p99 = pneg %p98
      // Predicated region
      $region9: #{tpu_custom_call.1} parent=5 // pred_check
        _
      $region10: #{tpu_custom_call.1} parent=5 // pred_check_branch
        %101 = sbr.rel (%p98) target = $region12
      $region11: #{tpu_custom_call.1} parent=5 // pred_region
        %s102 = ssub.s32 %s15, 1
        // Predicated region
        $region13: #{tpu_custom_call.1} parent=11 // pred_check
          %p103 = pneg %p62
        $region14: #{tpu_custom_call.1} parent=11 // pred_check_branch
          %105 = sbr.rel (%p103) target = $region16
        $region15: #{tpu_custom_call.1} parent=11 // pred_region
          %s107 = ssub.s32 128, 128
          %108 = vsyncadd [#allocation7], %s107
          %s110 = sshll.u32 [#allocation6], 4
          %s111 = int_to_ptr.vmem [resolvable:$true] %s110
          %113 = dma.hbm_to_vmem [thread:$0]  %s1, 128, %s111, [#allocation7]
        $region16: #{tpu_custom_call.1} parent=11 // pred_fallthru
          _
      $region12: #{tpu_custom_call.1} parent=5 // pred_fallthru
        _
      %p114 = scmp.lt.s32.totalorder %s15, 2
      // Predicated region
      $region17: #{tpu_custom_call.1} parent=5 // pred_check
        %p115 = pneg %p114
      $region18: #{tpu_custom_call.1} parent=5 // pred_check_branch
        %117 = sbr.rel (%p115) target = $region20
      $region19: #{tpu_custom_call.1} parent=5 // pred_region
        // Predicated region
        $region21: #{tpu_custom_call.1} parent=19 // pred_check
          %p118 = pneg %p35
        $region22: #{tpu_custom_call.1} parent=19 // pred_check_branch
          %120 = sbr.rel (%p118) target = $region24
        $region23: #{tpu_custom_call.1} parent=19 // pred_region
          %s121 = sand.u32 %s25, 1
          %s122 = scalar_lea.sflag [#allocation4], %s121
          %s123 = sand.u32 %s25, 1
          %s124 = smul.addr %s123, 4
          %s125 = scalar_lea.vmem [#allocation3], %s124
          %s127 = ssub.s32 64, 64
          %128 = vsyncadd %s122, %s127
          %s129 = smul.addr %s15, 64
          %s130 = scalar_lea.hbm %s0, %s129
          %s132 = sshll.u32 %s125, 4
          %s133 = int_to_ptr.vmem [resolvable:$true] %s132
          %135 = dma.hbm_to_vmem [thread:$0]  %s130, 64, %s133, %s122
        $region24: #{tpu_custom_call.1} parent=19 // pred_fallthru
          _
      $region20: #{tpu_custom_call.1} parent=5 // pred_fallthru
        _
      %p136 = scmp.le.s32.totalorder 1, %s15
      %p137 = scmp.lt.s32.totalorder %s15, 3
      %p138 = pnand %p136, %p137
      %p139 = pneg %p138
      // Predicated region
      $region25: #{tpu_custom_call.1} parent=5 // pred_check
        _
      $region26: #{tpu_custom_call.1} parent=5 // pred_check_branch
        %141 = sbr.rel (%p138) target = $region28
      $region27: #{tpu_custom_call.1} parent=5 // pred_region
        %s142 = ssub.s32 %s15, 1
        %s143 = sand.u32 %s28, 1
        %s144 = scalar_lea.sflag [#allocation4], %s143
        %s145 = sand.u32 %s28, 1
        %s146 = smul.addr %s145, 4
        %s147 = scalar_lea.vmem [#allocation3], %s146
        // Predicated region
        $region29: #{tpu_custom_call.1} parent=27 // pred_check
          %p148 = pneg %p41
        $region30: #{tpu_custom_call.1} parent=27 // pred_check_branch
          %150 = sbr.rel (%p148) target = $region32
        $region31: #{tpu_custom_call.1} parent=27 // pred_region
          %151 = dma.done %s144, 64
        $region32: #{tpu_custom_call.1} parent=27 // pred_fallthru
          _
        // Predicated region
        $region33: #{tpu_custom_call.1} parent=27 // pred_check
          %p152 = pneg %p62
        $region34: #{tpu_custom_call.1} parent=27 // pred_check_branch
          %154 = sbr.rel (%p152) target = $region36
        $region35: #{tpu_custom_call.1} parent=27 // pred_region
          %155 = dma.done [#allocation7], 128
        $region36: #{tpu_custom_call.1} parent=27 // pred_fallthru
          _
        %s156 = sand.u32 %s28, 1
        %s157 = scalar_lea.sflag [#allocation4], %s156
        %s158 = sand.u32 %s28, 1
        %s159 = smul.addr %s158, 4
        %s160 = scalar_lea.vmem [#allocation3], %s159
        %p161 = pneg %p41
        %p162 = pneg %p38
        %p163 = pneg %p62
        %p164 = pneg %p59
        %p165 = pneg %p88
        %p166 = pneg %p85
        %s167 = sand.u32 %s75, 1
        %s168 = scalar_lea.sflag [#allocation5], %s167
        %s169 = sand.u32 %s75, 1
        %s170 = smul.addr %s169, 8
        %s171 = scalar_lea.vmem [#allocation8], %s170
        %v172 = vld [vmem:[%s147] sm:$0xf]
        %vm173 = vcmask 125952
        %174 = vst.msk [vmem:[#allocation2] sm:$0xf] %vm173, %v172
        %175 = vst.msk [vmem:[#allocation2 + $0x4] sm:$0xf] %vm173, 0.0
        %v176 = vld [vmem:[%s147] sm:$0xf]
        %178 = vrot.lane.b32.xlu0 %v176, 127
        %v179 = vpop.permute.xlu0 %178
        %181 = vst.msk [vmem:[#allocation2 + $0x8] sm:$0xf] %vm173, %v179
        %182 = vst.msk [vmem:[#allocation2 + $0xc] sm:$0xf] %vm173, 0.0
        %v183 = vld [vmem:[%s147] sm:$0xf]
        %185 = vrot.lane.b32.xlu0 %v183, 126
        %v186 = vpop.permute.xlu0 %185
        %188 = vst.msk [vmem:[#allocation2 + $0x10] sm:$0xf] %vm173, %v186
        %189 = vst.msk [vmem:[#allocation2 + $0x14] sm:$0xf] %vm173, 0.0
        %v190 = vld [vmem:[#allocation6] sm:$0xff]
        %v191 = vld [vmem:[#allocation2] sm:$0xff]
        %v192 = vld [vmem:[#allocation2 + $0x8] sm:$0xff]
        %v193 = vld [vmem:[#allocation2 + $0x10] sm:$0xff]
        %vm194 = vcmask 195584
        %v196 = vsel %vm194, %v190, 0
        %198 = vmatprep.subr.mxu0 0.0
        %199 = vmatpush1.msra.mxu0 0.0
        %200 = vmatprep.subr.mxu0 0.0
        %201 = vmatpush1.msra.mxu0 0.0
        %202 = vmatprep.subr.mxu0 0.0
        %203 = vmatpush1.msra.mxu0 0.0
        %204 = vmatprep.subr.mxu0 0.0
        %205 = vmatpush1.msra.mxu0 0.0
        %206 = vmatprep.subr.mxu0 0.0
        %207 = vmatpush1.msra.mxu0 0.0
        %208 = vmatprep.subr.mxu0 0.0
        %209 = vmatpush1.msra.mxu0 0.0
        %210 = vmatprep.subr.mxu0 0.0
        %211 = vmatpush1.msra.mxu0 0.0
        %212 = vmatprep.subr.mxu0 0.0
        %213 = vmatpush1.msra.mxu0 0.0
        %214 = vmatprep.subr.mxu0 0.0
        %215 = vmatpush1.msra.mxu0 0.0
        %216 = vmatprep.subr.mxu0 0.0
        %217 = vmatpush1.msra.mxu0 0.0
        %218 = vmatprep.subr.mxu0 0.0
        %219 = vmatpush1.msra.mxu0 0.0
        %220 = vmatprep.subr.mxu0 0.0
        %221 = vmatpush1.msra.mxu0 0.0
        %222 = vmatprep.subr.mxu0 0.0
        %223 = vmatpush1.msra.mxu0 0.0
        %224 = vmatprep.subr.mxu0 0.0
        %225 = vmatpush1.msra.mxu0 %v193
        %226 = vmatprep.subr.mxu0 0.0
        %227 = vmatpush1.msra.mxu0 %v192
        %228 = vmatprep.subr.mxu0 0.0
        %229 = vmatpush1.msra.mxu0 %v191
        %230 = vmatprep.subr.mxu0 0.0
        %231 = vmatpush2.msra.mxu0 0.0
        %232 = vmatprep.subr.mxu0 0.0
        %233 = vmatpush2.msra.mxu0 0.0
        %234 = vmatprep.subr.mxu0 0.0
        %235 = vmatpush2.msra.mxu0 0.0
        %236 = vmatprep.subr.mxu0 0.0
        %237 = vmatpush2.msra.mxu0 0.0
        %238 = vmatprep.subr.mxu0 0.0
        %239 = vmatpush2.msra.mxu0 0.0
        %240 = vmatprep.subr.mxu0 0.0
        %241 = vmatpush2.msra.mxu0 0.0
        %242 = vmatprep.subr.mxu0 0.0
        %243 = vmatpush2.msra.mxu0 0.0
        %244 = vmatprep.subr.mxu0 0.0
        %245 = vmatpush2.msra.mxu0 0.0
        %246 = vmatprep.subr.mxu0 0.0
        %247 = vmatpush2.msra.mxu0 0.0
        %248 = vmatprep.subr.mxu0 0.0
        %249 = vmatpush2.msra.mxu0 0.0
        %250 = vmatprep.subr.mxu0 0.0
        %251 = vmatpush2.msra.mxu0 0.0
        %252 = vmatprep.subr.mxu0 0.0
        %253 = vmatpush2.msra.mxu0 0.0
        %254 = vmatprep.subr.mxu0 0.0
        %255 = vmatpush2.msra.mxu0 0.0
        %256 = vmatprep.subr.mxu0 0.0
        %257 = vmatpush2.msra.mxu0 0.0
        %258 = vmatprep.subr.mxu0 0.0
        %259 = vmatpush2.msra.mxu0 0.0
        %260 = vmatprep.subr.mxu0 0.0
        %261 = vmatpush2.msra.mxu0 0.0
        %262 = vmatprep.mubr.f32.mxu0 0.0
        %263 = vmatmul.mubr.f32.gmra.mxu0 %v196
        %v264 = vpop.f32.mrf.mxu0
        %v265 = vadd.f32 0.0, %v264
        %v266 = vpop.f32.mrf.mxu0
        %267 = vdwg.mxu0
        %vm268 = vcmask 130048
        %269 = vst.msk [vmem:[%s171] sm:$0xff] %vm268, %v265
        %s270 = sand.u32 %s75, 1
        %s271 = scalar_lea.sflag [#allocation5], %s270
        %s272 = sand.u32 %s75, 1
        %s273 = smul.addr %s272, 8
        %s274 = scalar_lea.vmem [#allocation8], %s273
        // Predicated region
        $region37: #{tpu_custom_call.1} parent=27 // pred_check
          %p275 = pneg %p85
        $region38: #{tpu_custom_call.1} parent=27 // pred_check_branch
          %277 = sbr.rel (%p275) target = $region40
        $region39: #{tpu_custom_call.1} parent=27 // pred_region
          %s279 = ssub.s32 128, 128
          %280 = vsyncadd %s271, %s279
          %s281 = smul.addr %s20, 128
          %s282 = scalar_lea.hbm %s2, %s281
          %s284 = sshll.u32 %s274, 4
          %s285 = int_to_ptr.vmem [resolvable:$true] %s284
          %287 = dma.vmem_to_hbm [thread:$0]  %s285, 128, %s282, %s271
        $region40: #{tpu_custom_call.1} parent=27 // pred_fallthru
          _
      $region28: #{tpu_custom_call.1} parent=5 // pred_fallthru
        _
      %p288 = scmp.le.s32.totalorder 2, %s15
      // Predicated region
      $region41: #{tpu_custom_call.1} parent=5 // pred_check
        %p289 = pneg %p288
      $region42: #{tpu_custom_call.1} parent=5 // pred_check_branch
        %291 = sbr.rel (%p289) target = $region44
      $region43: #{tpu_custom_call.1} parent=5 // pred_region
        %s292 = ssub.s32 %s15, 2
        // Predicated region
        $region45: #{tpu_custom_call.1} parent=43 // pred_check
          %p293 = pneg %p91
        $region46: #{tpu_custom_call.1} parent=43 // pred_check_branch
          %295 = sbr.rel (%p293) target = $region48
        $region47: #{tpu_custom_call.1} parent=43 // pred_region
          %s296 = sand.u32 %s76, 1
          %s297 = scalar_lea.sflag [#allocation5], %s296
          %s298 = sand.u32 %s76, 1
          %s299 = smul.addr %s298, 8
          %s300 = scalar_lea.vmem [#allocation8], %s299
          %301 = dma.done %s297, 128
        $region48: #{tpu_custom_call.1} parent=43 // pred_fallthru
          _
      $region44: #{tpu_custom_call.1} parent=5 // pred_fallthru
        _
    $region6: #{tpu_custom_call.1} parent=1 // loop_footer
      %s19 = sadd.s32 1, %s15
    $region7: #{tpu_custom_call.1} parent=1 // loop_footer_branch
      %14 = sbr.rel target = $region3
    $region8: #{tpu_custom_call.1} parent=1 // loop_exit
      _
    %302 = vsyncpa [#allocation4], 1
    %s303 = scalar_lea.sflag [#allocation4], 1
    %304 = vsyncpa %s303, 1
    %305 = vsyncpa [#allocation7], 1
    %306 = vsyncpa [#allocation5], 1
    %s307 = scalar_lea.sflag [#allocation5], 1
    %308 = vsyncpa %s307, 1

</llo_original>
